<compile_context>
chip_gen: v7x
topology: tpu7x:2x2x1
jax: 0.10.0
libtpu: 0.0.40
codegen_flags: <defaults>
</compile_context>

<pallas_src>
import jax
import jax.numpy as jnp
from jax import lax
from jax.experimental import pallas as pl
from jax.experimental.pallas import tpu as pltpu

BN_EPS = 1e-5


def _round_up(n, m):
    return ((n + m - 1) // m) * m


# ---------------------------------------------------------------------------
# Kernel
# ---------------------------------------------------------------------------
def cnn2_kernel(x_ref,                       # [9, TB, Cp]   bf16  (spatial-major)
                w1_ref, b1_ref,              # [4*Cp, Cp] bf16, [1, Cp] f32 (BN folded)
                w2_ref, b2_ref,              # [4*Cp, Cp] bf16, [1, Cp] f32 (BN folded)
                wfc_ref, bfc_ref,            # [Cp, NCp] bf16,  [1, NCp] f32
                out_ref):                    # [TB, NCp] f32
    b1 = b1_ref[...]
    b2 = b2_ref[...]
    w1 = w1_ref[...]

    # ---- conv block 1 (3x3 -> 2x2): per output position an im2col matmul ----
    h1 = []
    for oh in range(2):
        for ow in range(2):
            xin = jnp.concatenate(
                [x_ref[(oh + kh) * 3 + (ow + kw)] for kh in range(2) for kw in range(2)],
                axis=-1)                                            # [TB, 4*Cp] bf16
            y = jnp.dot(xin, w1, preferred_element_type=jnp.float32)
            h1.append(jnp.maximum(y + b1, 0.0).astype(jnp.bfloat16))

    # ---- conv block 2 (2x2 -> 1x1): single im2col matmul over the 4 positions ----
    h1_cat = jnp.concatenate(h1, axis=-1)                           # [TB, 4*Cp] bf16
    y2 = jnp.dot(h1_cat, w2_ref[...], preferred_element_type=jnp.float32)
    h2 = jnp.maximum(y2 + b2, 0.0).astype(jnp.bfloat16)             # [TB, Cp]

    # ---- fc (flatten of 1x1 spatial is a no-op) ----
    logits = jnp.dot(h2, wfc_ref[...], preferred_element_type=jnp.float32) + bfc_ref[...]
    out_ref[...] = logits.astype(out_ref.dtype)


# ---------------------------------------------------------------------------
# One-time parameter preprocessing (BN folding, im2col layout, padding, bf16)
# ---------------------------------------------------------------------------
def preprocess_params(params, num_classes, lane=128):
    (w1, b1, g1, be1, m1, v1,
     w2, b2, g2, be2, m2, v2,
     wfc, bfc) = params
    C = w1.shape[0]
    Cp = _round_up(C, lane)
    NCp = _round_up(num_classes, lane)

    def fold_bn(w, b, g, be, m, v):
        # eval-mode BN folded into conv weight/bias (computed in f32, exact)
        s = g * lax.rsqrt(v + BN_EPS)                       # [Cout]
        return w * s[:, None, None, None], (b - m) * s + be

    def conv_to_im2col(w_f):
        # OIHW [Cout, Cin, 2, 2] -> [4*Cp, Cp]   (tap-major rows: kh*2+kw)
        wk = jnp.transpose(w_f, (2, 3, 1, 0)).reshape(4, C, C)
        wk = jnp.pad(wk, ((0, 0), (0, Cp - C), (0, Cp - C)))
        return wk.reshape(4 * Cp, Cp).astype(jnp.bfloat16)

    w1f, b1f = fold_bn(w1, b1, g1, be1, m1, v1)
    w2f, b2f = fold_bn(w2, b2, g2, be2, m2, v2)

    w1k = conv_to_im2col(w1f)
    w2k = conv_to_im2col(w2f)
    b1k = jnp.pad(b1f, (0, Cp - C)).reshape(1, Cp).astype(jnp.float32)
    b2k = jnp.pad(b2f, (0, Cp - C)).reshape(1, Cp).astype(jnp.float32)
    wfck = jnp.pad(wfc.T, ((0, Cp - C), (0, NCp - num_classes))).astype(jnp.bfloat16)
    bfck = jnp.pad(bfc, (0, NCp - num_classes)).reshape(1, NCp).astype(jnp.float32)
    return (w1k, b1k, w2k, b2k, wfck, bfck)


# ---------------------------------------------------------------------------
# Forward wrapper
# ---------------------------------------------------------------------------
def cnn2_forward(x_nchw, prep, num_classes, block_b=256, vmem_limit_bytes=None):
    """x_nchw: [B, C, 3, 3] float32.  Returns logits [B, num_classes] float32."""
    w1k, b1k, w2k, b2k, wfck, bfck = prep
    B, C, H, W = x_nchw.shape
    assert H == 3 and W == 3, "CNN2 fc expects 1x1 spatial after two k=2 convs"
    Cp = w1k.shape[1]
    NCp = wfck.shape[1]

    # batch tile: bf16 sublane multiple (16), capped at block_b
    TB = min(block_b, _round_up(B, 16))
    Bp = _round_up(B, TB)

    # input layout plumbing: NCHW -> [HW, B, C], pad batch/channels, bf16
    xk = jnp.transpose(x_nchw, (2, 3, 0, 1)).reshape(H * W, B, C)
    xk = jnp.pad(xk, ((0, 0), (0, Bp - B), (0, Cp - C))).astype(jnp.bfloat16)

    resident = lambda i: (0, 0)   # weights/biases stay VMEM-resident across batch tiles

    cp_kwargs = dict(dimension_semantics=("parallel",))
    if vmem_limit_bytes is not None:
        cp_kwargs["vmem_limit_bytes"] = vmem_limit_bytes

    out = pl.pallas_call(
        cnn2_kernel,
        out_shape=jax.ShapeDtypeStruct((Bp, NCp), jnp.float32),
        grid_spec=pltpu.PrefetchScalarGridSpec(
            num_scalar_prefetch=0,
            grid=(Bp // TB,),
            in_specs=[
                pl.BlockSpec((H * W, TB, Cp), lambda i: (0, i, 0)),
                pl.BlockSpec((4 * Cp, Cp), resident),
                pl.BlockSpec((1, Cp), resident),
                pl.BlockSpec((4 * Cp, Cp), resident),
                pl.BlockSpec((1, Cp), resident),
                pl.BlockSpec((Cp, NCp), resident),
                pl.BlockSpec((1, NCp), resident),
            ],
            out_specs=pl.BlockSpec((TB, NCp), lambda i: (i, 0)),
        ),
        compiler_params=pltpu.CompilerParams(**cp_kwargs),
    )(xk, w1k, b1k, w2k, b2k, wfck, bfck)

    return out[:B, :num_classes]


# ---------------------------------------------------------------------------
# Pure-JAX reference (f32, eval-mode BN) mimicking the PyTorch forward
# ---------------------------------------------------------------------------
def cnn2_reference(x_nchw, params):
    (w1, b1, g1, be1, m1, v1,
     w2, b2, g2, be2, m2, v2,
     wfc, bfc) = params

    def block(x, w, b, g, be, m, v):
        y = lax.conv_general_dilated(x, w, window_strides=(1, 1), padding='VALID',
                                     dimension_numbers=('NCHW', 'OIHW', 'NCHW'))
        y = y + b[None, :, None, None]
        y = (y - m[None, :, None, None]) / jnp.sqrt(v[None, :, None, None] + BN_EPS) \
            * g[None, :, None, None] + be[None, :, None, None]
        return jnp.maximum(y, 0.0)

    x = block(x_nchw, w1, b1, g1, be1, m1, v1)
    x = block(x, w2, b2, g2, be2, m2, v2)
    x = x.reshape(x.shape[0], -1)
    return x @ wfc.T + bfc[None, :]


def init_params(key, channel_size, num_classes):
    C = channel_size
    ks = jax.random.split(key, 6)
    kconv = 1.0 / jnp.sqrt(jnp.float32(C * 2 * 2))
    kfc = 1.0 / jnp.sqrt(jnp.float32(C))
    u = lambda k, shape, lim: jax.random.uniform(k, shape, jnp.float32, -lim, lim)
    # conv weights in PyTorch OIHW layout; fc weight in PyTorch [out, in] layout
    w1 = u(ks[0], (C, C, 2, 2), kconv); b1 = u(ks[1], (C,), kconv)
    w2 = u(ks[2], (C, C, 2, 2), kconv); b2 = u(ks[3], (C,), kconv)
    wfc = u(ks[4], (num_classes, C), kfc); bfc = u(ks[5], (num_classes,), kfc)
    # BatchNorm2d default init / running stats (eval-mode semantics)
    ones, zeros = jnp.ones((C,), jnp.float32), jnp.zeros((C,), jnp.float32)
    g1, be1, m1, v1 = ones, zeros, zeros, ones
    g2, be2, m2, v2 = ones, zeros, zeros, ones
    return (w1, b1, g1, be1, m1, v1,
            w2, b2, g2, be2, m2, v2,
            wfc, bfc)


if __name__ == "__main__":
    B, C, num_classes = 2, 4, 8
    key = jax.random.PRNGKey(0)
    kx, kp = jax.random.split(key)
    x = jax.random.normal(kx, (B, C, 3, 3), jnp.float32)   # NCHW, spatial 3x3
    params = init_params(kp, C, num_classes)

    prep = preprocess_params(params, num_classes)          # one-time, outside forward path
    out = jax.block_until_ready(cnn2_forward(x, prep, num_classes))
    ref = jax.block_until_ready(cnn2_reference(x, params))

    assert out.shape == (B, num_classes)
    # bf16 MXU operands vs. pure-f32 reference -> loosened tolerance
    assert jnp.allclose(out, ref, atol=1e-1, rtol=1e-1), (out, ref)
    print("KERNEL_OK")
</pallas_src>

<mosaic_0001>
module attributes {stable_mosaic.version = 11 : i64} {
  func.func @cnn2_kernel(%arg0: i32, %arg1: memref<9x16x128xbf16, #tpu.memory_space<vmem>>, %arg2: memref<512x128xbf16, #tpu.memory_space<vmem>>, %arg3: memref<1x128xf32, #tpu.memory_space<vmem>>, %arg4: memref<512x128xbf16, #tpu.memory_space<vmem>>, %arg5: memref<1x128xf32, #tpu.memory_space<vmem>>, %arg6: memref<128x128xbf16, #tpu.memory_space<vmem>>, %arg7: memref<1x128xf32, #tpu.memory_space<vmem>>, %arg8: memref<16x128xf32, #tpu.memory_space<vmem>>) attributes {dimension_semantics = [#tpu.dimension_semantics<parallel>], iteration_bounds = array<i64: 1>, scalar_prefetch = 0 : i64, scratch_operands = 0 : i64, tpu.core_type = #tpu.core_type<tc>, window_params = [{transform_indices = @transform_0, window_bounds = array<i64: 9, 16, 128>}, {pipeline_mode = #tpu.pipeline_mode<synchronous>, transform_indices = @transform_1, window_bounds = array<i64: 512, 128>}, {pipeline_mode = #tpu.pipeline_mode<synchronous>, transform_indices = @transform_2, window_bounds = array<i64: 1, 128>}, {pipeline_mode = #tpu.pipeline_mode<synchronous>, transform_indices = @transform_3, window_bounds = array<i64: 512, 128>}, {pipeline_mode = #tpu.pipeline_mode<synchronous>, transform_indices = @transform_4, window_bounds = array<i64: 1, 128>}, {pipeline_mode = #tpu.pipeline_mode<synchronous>, transform_indices = @transform_5, window_bounds = array<i64: 128, 128>}, {pipeline_mode = #tpu.pipeline_mode<synchronous>, transform_indices = @transform_6, window_bounds = array<i64: 1, 128>}, {transform_indices = @transform_7, window_bounds = array<i64: 16, 128>}]} {
    %c0 = arith.constant 0 : index
    %c0_0 = arith.constant 0 : index
    %0 = vector.load %arg3[%c0, %c0_0] : memref<1x128xf32, #tpu.memory_space<vmem>>, vector<1x128xf32>
    %c0_1 = arith.constant 0 : index
    %c0_2 = arith.constant 0 : index
    %1 = vector.load %arg5[%c0_1, %c0_2] : memref<1x128xf32, #tpu.memory_space<vmem>>, vector<1x128xf32>
    %c0_3 = arith.constant 0 : index
    %c0_4 = arith.constant 0 : index
    %2 = vector.load %arg2[%c0_3, %c0_4] : memref<512x128xbf16, #tpu.memory_space<vmem>>, vector<512x128xbf16>
    %c0_5 = arith.constant 0 : index
    %c0_6 = arith.constant 0 : index
    %c0_7 = arith.constant 0 : index
    %3 = vector.load %arg1[%c0_5, %c0_6, %c0_7] : memref<9x16x128xbf16, #tpu.memory_space<vmem>>, vector<1x16x128xbf16>
    %4 = vector.shape_cast %3 : vector<1x16x128xbf16> to vector<16x128xbf16>
    %c1 = arith.constant 1 : index
    %c0_8 = arith.constant 0 : index
    %c0_9 = arith.constant 0 : index
    %5 = vector.load %arg1[%c1, %c0_8, %c0_9] : memref<9x16x128xbf16, #tpu.memory_space<vmem>>, vector<1x16x128xbf16>
    %6 = vector.shape_cast %5 : vector<1x16x128xbf16> to vector<16x128xbf16>
    %c3 = arith.constant 3 : index
    %c0_10 = arith.constant 0 : index
    %c0_11 = arith.constant 0 : index
    %7 = vector.load %arg1[%c3, %c0_10, %c0_11] : memref<9x16x128xbf16, #tpu.memory_space<vmem>>, vector<1x16x128xbf16>
    %8 = vector.shape_cast %7 : vector<1x16x128xbf16> to vector<16x128xbf16>
    %c4 = arith.constant 4 : index
    %c0_12 = arith.constant 0 : index
    %c0_13 = arith.constant 0 : index
    %9 = vector.load %arg1[%c4, %c0_12, %c0_13] : memref<9x16x128xbf16, #tpu.memory_space<vmem>>, vector<1x16x128xbf16>
    %10 = vector.shape_cast %9 : vector<1x16x128xbf16> to vector<16x128xbf16>
    %11 = tpu.concatenate %4, %6, %8, %10 in 1 : vector<16x128xbf16>, vector<16x128xbf16>, vector<16x128xbf16>, vector<16x128xbf16> -> vector<16x512xbf16>
    %cst = arith.constant dense<0.000000e+00> : vector<16x128xf32>
    %12 = tpu.matmul %11, %2, %cst {dimension_numbers = #tpu.dot_dimension_numbers<[1], [0], [0], [1], [0, 0, 1, 1], [], []>} : vector<16x512xbf16>, vector<512x128xbf16>, vector<16x128xf32> -> vector<16x128xf32>
    %13 = vector.broadcast %0 : vector<1x128xf32> to vector<16x128xf32>
    %14 = arith.addf %12, %13 : vector<16x128xf32>
    %cst_14 = arith.constant 0.000000e+00 : f32
    %15 = vector.broadcast %cst_14 : f32 to vector<16x128xf32>
    %16 = arith.maximumf %14, %15 : vector<16x128xf32>
    %17 = arith.truncf %16 : vector<16x128xf32> to vector<16x128xbf16>
    %c1_15 = arith.constant 1 : index
    %c0_16 = arith.constant 0 : index
    %c0_17 = arith.constant 0 : index
    %18 = vector.load %arg1[%c1_15, %c0_16, %c0_17] : memref<9x16x128xbf16, #tpu.memory_space<vmem>>, vector<1x16x128xbf16>
    %19 = vector.shape_cast %18 : vector<1x16x128xbf16> to vector<16x128xbf16>
    %c2 = arith.constant 2 : index
    %c0_18 = arith.constant 0 : index
    %c0_19 = arith.constant 0 : index
    %20 = vector.load %arg1[%c2, %c0_18, %c0_19] : memref<9x16x128xbf16, #tpu.memory_space<vmem>>, vector<1x16x128xbf16>
    %21 = vector.shape_cast %20 : vector<1x16x128xbf16> to vector<16x128xbf16>
    %c4_20 = arith.constant 4 : index
    %c0_21 = arith.constant 0 : index
    %c0_22 = arith.constant 0 : index
    %22 = vector.load %arg1[%c4_20, %c0_21, %c0_22] : memref<9x16x128xbf16, #tpu.memory_space<vmem>>, vector<1x16x128xbf16>
    %23 = vector.shape_cast %22 : vector<1x16x128xbf16> to vector<16x128xbf16>
    %c5 = arith.constant 5 : index
    %c0_23 = arith.constant 0 : index
    %c0_24 = arith.constant 0 : index
    %24 = vector.load %arg1[%c5, %c0_23, %c0_24] : memref<9x16x128xbf16, #tpu.memory_space<vmem>>, vector<1x16x128xbf16>
    %25 = vector.shape_cast %24 : vector<1x16x128xbf16> to vector<16x128xbf16>
    %26 = tpu.concatenate %19, %21, %23, %25 in 1 : vector<16x128xbf16>, vector<16x128xbf16>, vector<16x128xbf16>, vector<16x128xbf16> -> vector<16x512xbf16>
    %cst_25 = arith.constant dense<0.000000e+00> : vector<16x128xf32>
    %27 = tpu.matmul %26, %2, %cst_25 {dimension_numbers = #tpu.dot_dimension_numbers<[1], [0], [0], [1], [0, 0, 1, 1], [], []>} : vector<16x512xbf16>, vector<512x128xbf16>, vector<16x128xf32> -> vector<16x128xf32>
    %28 = vector.broadcast %0 : vector<1x128xf32> to vector<16x128xf32>
    %29 = arith.addf %27, %28 : vector<16x128xf32>
    %cst_26 = arith.constant 0.000000e+00 : f32
    %30 = vector.broadcast %cst_26 : f32 to vector<16x128xf32>
    %31 = arith.maximumf %29, %30 : vector<16x128xf32>
    %32 = arith.truncf %31 : vector<16x128xf32> to vector<16x128xbf16>
    %c3_27 = arith.constant 3 : index
    %c0_28 = arith.constant 0 : index
    %c0_29 = arith.constant 0 : index
    %33 = vector.load %arg1[%c3_27, %c0_28, %c0_29] : memref<9x16x128xbf16, #tpu.memory_space<vmem>>, vector<1x16x128xbf16>
    %34 = vector.shape_cast %33 : vector<1x16x128xbf16> to vector<16x128xbf16>
    %c4_30 = arith.constant 4 : index
    %c0_31 = arith.constant 0 : index
    %c0_32 = arith.constant 0 : index
    %35 = vector.load %arg1[%c4_30, %c0_31, %c0_32] : memref<9x16x128xbf16, #tpu.memory_space<vmem>>, vector<1x16x128xbf16>
    %36 = vector.shape_cast %35 : vector<1x16x128xbf16> to vector<16x128xbf16>
    %c6 = arith.constant 6 : index
    %c0_33 = arith.constant 0 : index
    %c0_34 = arith.constant 0 : index
    %37 = vector.load %arg1[%c6, %c0_33, %c0_34] : memref<9x16x128xbf16, #tpu.memory_space<vmem>>, vector<1x16x128xbf16>
    %38 = vector.shape_cast %37 : vector<1x16x128xbf16> to vector<16x128xbf16>
    %c7 = arith.constant 7 : index
    %c0_35 = arith.constant 0 : index
    %c0_36 = arith.constant 0 : index
    %39 = vector.load %arg1[%c7, %c0_35, %c0_36] : memref<9x16x128xbf16, #tpu.memory_space<vmem>>, vector<1x16x128xbf16>
    %40 = vector.shape_cast %39 : vector<1x16x128xbf16> to vector<16x128xbf16>
    %41 = tpu.concatenate %34, %36, %38, %40 in 1 : vector<16x128xbf16>, vector<16x128xbf16>, vector<16x128xbf16>, vector<16x128xbf16> -> vector<16x512xbf16>
    %cst_37 = arith.constant dense<0.000000e+00> : vector<16x128xf32>
    %42 = tpu.matmul %41, %2, %cst_37 {dimension_numbers = #tpu.dot_dimension_numbers<[1], [0], [0], [1], [0, 0, 1, 1], [], []>} : vector<16x512xbf16>, vector<512x128xbf16>, vector<16x128xf32> -> vector<16x128xf32>
    %43 = vector.broadcast %0 : vector<1x128xf32> to vector<16x128xf32>
    %44 = arith.addf %42, %43 : vector<16x128xf32>
    %cst_38 = arith.constant 0.000000e+00 : f32
    %45 = vector.broadcast %cst_38 : f32 to vector<16x128xf32>
    %46 = arith.maximumf %44, %45 : vector<16x128xf32>
    %47 = arith.truncf %46 : vector<16x128xf32> to vector<16x128xbf16>
    %c4_39 = arith.constant 4 : index
    %c0_40 = arith.constant 0 : index
    %c0_41 = arith.constant 0 : index
    %48 = vector.load %arg1[%c4_39, %c0_40, %c0_41] : memref<9x16x128xbf16, #tpu.memory_space<vmem>>, vector<1x16x128xbf16>
    %49 = vector.shape_cast %48 : vector<1x16x128xbf16> to vector<16x128xbf16>
    %c5_42 = arith.constant 5 : index
    %c0_43 = arith.constant 0 : index
    %c0_44 = arith.constant 0 : index
    %50 = vector.load %arg1[%c5_42, %c0_43, %c0_44] : memref<9x16x128xbf16, #tpu.memory_space<vmem>>, vector<1x16x128xbf16>
    %51 = vector.shape_cast %50 : vector<1x16x128xbf16> to vector<16x128xbf16>
    %c7_45 = arith.constant 7 : index
    %c0_46 = arith.constant 0 : index
    %c0_47 = arith.constant 0 : index
    %52 = vector.load %arg1[%c7_45, %c0_46, %c0_47] : memref<9x16x128xbf16, #tpu.memory_space<vmem>>, vector<1x16x128xbf16>
    %53 = vector.shape_cast %52 : vector<1x16x128xbf16> to vector<16x128xbf16>
    %c8 = arith.constant 8 : index
    %c0_48 = arith.constant 0 : index
    %c0_49 = arith.constant 0 : index
    %54 = vector.load %arg1[%c8, %c0_48, %c0_49] : memref<9x16x128xbf16, #tpu.memory_space<vmem>>, vector<1x16x128xbf16>
    %55 = vector.shape_cast %54 : vector<1x16x128xbf16> to vector<16x128xbf16>
    %56 = tpu.concatenate %49, %51, %53, %55 in 1 : vector<16x128xbf16>, vector<16x128xbf16>, vector<16x128xbf16>, vector<16x128xbf16> -> vector<16x512xbf16>
    %cst_50 = arith.constant dense<0.000000e+00> : vector<16x128xf32>
    %57 = tpu.matmul %56, %2, %cst_50 {dimension_numbers = #tpu.dot_dimension_numbers<[1], [0], [0], [1], [0, 0, 1, 1], [], []>} : vector<16x512xbf16>, vector<512x128xbf16>, vector<16x128xf32> -> vector<16x128xf32>
    %58 = vector.broadcast %0 : vector<1x128xf32> to vector<16x128xf32>
    %59 = arith.addf %57, %58 : vector<16x128xf32>
    %cst_51 = arith.constant 0.000000e+00 : f32
    %60 = vector.broadcast %cst_51 : f32 to vector<16x128xf32>
    %61 = arith.maximumf %59, %60 : vector<16x128xf32>
    %62 = arith.truncf %61 : vector<16x128xf32> to vector<16x128xbf16>
    %63 = tpu.concatenate %17, %32, %47, %62 in 1 : vector<16x128xbf16>, vector<16x128xbf16>, vector<16x128xbf16>, vector<16x128xbf16> -> vector<16x512xbf16>
    %c0_52 = arith.constant 0 : index
    %c0_53 = arith.constant 0 : index
    %64 = vector.load %arg4[%c0_52, %c0_53] : memref<512x128xbf16, #tpu.memory_space<vmem>>, vector<512x128xbf16>
    %cst_54 = arith.constant dense<0.000000e+00> : vector<16x128xf32>
    %65 = tpu.matmul %63, %64, %cst_54 {dimension_numbers = #tpu.dot_dimension_numbers<[1], [0], [0], [1], [0, 0, 1, 1], [], []>} : vector<16x512xbf16>, vector<512x128xbf16>, vector<16x128xf32> -> vector<16x128xf32>
    %66 = vector.broadcast %1 : vector<1x128xf32> to vector<16x128xf32>
    %67 = arith.addf %65, %66 : vector<16x128xf32>
    %cst_55 = arith.constant 0.000000e+00 : f32
    %68 = vector.broadcast %cst_55 : f32 to vector<16x128xf32>
    %69 = arith.maximumf %67, %68 : vector<16x128xf32>
    %70 = arith.truncf %69 : vector<16x128xf32> to vector<16x128xbf16>
    %c0_56 = arith.constant 0 : index
    %c0_57 = arith.constant 0 : index
    %71 = vector.load %arg6[%c0_56, %c0_57] : memref<128x128xbf16, #tpu.memory_space<vmem>>, vector<128x128xbf16>
    %cst_58 = arith.constant dense<0.000000e+00> : vector<16x128xf32>
    %72 = tpu.matmul %70, %71, %cst_58 {dimension_numbers = #tpu.dot_dimension_numbers<[1], [0], [0], [1], [0, 0, 1, 1], [], []>} : vector<16x128xbf16>, vector<128x128xbf16>, vector<16x128xf32> -> vector<16x128xf32>
    %c0_59 = arith.constant 0 : index
    %c0_60 = arith.constant 0 : index
    %73 = vector.load %arg7[%c0_59, %c0_60] : memref<1x128xf32, #tpu.memory_space<vmem>>, vector<1x128xf32>
    %74 = vector.broadcast %73 : vector<1x128xf32> to vector<16x128xf32>
    %75 = arith.addf %72, %74 : vector<16x128xf32>
    %c0_61 = arith.constant 0 : index
    %c0_62 = arith.constant 0 : index
    %76 = vector.load %arg8[%c0_61, %c0_62] : memref<16x128xf32, #tpu.memory_space<vmem>>, vector<16x128xf32>
    tpu.vector_store %arg8[%c0_61, %c0_62], %75 {strides = array<i32>} : memref<16x128xf32, #tpu.memory_space<vmem>>, vector<16x128xf32>,
    return
  }
  func.func @transform_0(%arg0: i32) -> (i32, i32, i32) {
    %c0_i32 = arith.constant 0 : i32
    %c0_i32_0 = arith.constant 0 : i32
    %c0_i32_1 = arith.constant 0 : i32
    return %c0_i32, %arg0, %c0_i32_0 : i32, i32, i32
  }
  func.func @transform_1(%arg0: i32) -> (i32, i32) {
    %c0_i32 = arith.constant 0 : i32
    %c0_i32_0 = arith.constant 0 : i32
    %c0_i32_1 = arith.constant 0 : i32
    return %c0_i32, %c0_i32_0 : i32, i32
  }
  func.func @transform_2(%arg0: i32) -> (i32, i32) {
    %c0_i32 = arith.constant 0 : i32
    %c0_i32_0 = arith.constant 0 : i32
    %c0_i32_1 = arith.constant 0 : i32
    return %c0_i32, %c0_i32_0 : i32, i32
  }
  func.func @transform_3(%arg0: i32) -> (i32, i32) {
    %c0_i32 = arith.constant 0 : i32
    %c0_i32_0 = arith.constant 0 : i32
    %c0_i32_1 = arith.constant 0 : i32
    return %c0_i32, %c0_i32_0 : i32, i32
  }
  func.func @transform_4(%arg0: i32) -> (i32, i32) {
    %c0_i32 = arith.constant 0 : i32
    %c0_i32_0 = arith.constant 0 : i32
    %c0_i32_1 = arith.constant 0 : i32
    return %c0_i32, %c0_i32_0 : i32, i32
  }
  func.func @transform_5(%arg0: i32) -> (i32, i32) {
    %c0_i32 = arith.constant 0 : i32
    %c0_i32_0 = arith.constant 0 : i32
    %c0_i32_1 = arith.constant 0 : i32
    return %c0_i32, %c0_i32_0 : i32, i32
  }
  func.func @transform_6(%arg0: i32) -> (i32, i32) {
    %c0_i32 = arith.constant 0 : i32
    %c0_i32_0 = arith.constant 0 : i32
    %c0_i32_1 = arith.constant 0 : i32
    return %c0_i32, %c0_i32_0 : i32, i32
  }
  func.func @transform_7(%arg0: i32) -> (i32, i32) {
    %c0_i32 = arith.constant 0 : i32
    %c0_i32_0 = arith.constant 0 : i32
    return %arg0, %c0_i32 : i32, i32
  }
}

</mosaic_0001>

<llo_original>
// kernel: tpu_custom_call.1
$region0: #{tpu_custom_call.1}
  #allocation0 [shape = 'u32[]', space=smem, size = 0x4, offset = 0x4, fixed_abs, tag = 'smem constant byte address 0x4 - core index']
  #allocation1 [shape = 'u32[144,128]{1,0:T(1,128)}', space=vmem, size = 0x12000, scoped, tag = 'internal scratch']
  %s0 = inlined_call_operand.hbm [shape: bf16[9,16,128], index: 0, kind: input, shape index: {}]
  %s1 = inlined_call_operand.hbm [shape: bf16[512,128], index: 1, kind: input, shape index: {}]
  %s2 = inlined_call_operand.vmem [shape: f32[1,128], index: 2, kind: input, shape index: {}]
  %s3 = inlined_call_operand.hbm [shape: bf16[512,128], index: 3, kind: input, shape index: {}]
  %s4 = inlined_call_operand.vmem [shape: f32[1,128], index: 4, kind: input, shape index: {}]
  %s5 = inlined_call_operand.hbm [shape: bf16[128,128], index: 5, kind: input, shape index: {}]
  %s6 = inlined_call_operand.vmem [shape: f32[1,128], index: 6, kind: input, shape index: {}]
  %s7 = inlined_call_operand.hbm [shape: f32[16,128], index: 7, kind: output, shape index: {}]
  %s8 = sld [smem:[#allocation0]]
  $region54: #{tpu_custom_call.1} parent=0
    _
  %s10 = ssub.s32 1, %s8
  %s11 = scalar_select 0, %s10, %s8
  $region1: #{tpu_custom_call.1} parent=0
    #allocation2 [shape = 'u8[36864]{0}', space=vmem, size = 0x9000, scoped, tag = 'input window, operand 0, single buffered']
    #allocation3 [shape = 's32[1]{0}', space=sflag, size = 0x4, scoped, tag = 'scoped memory for tpu_custom_call.1']
    #allocation4 [shape = 's32[1]{0}', space=sflag, size = 0x4, scoped, tag = 'scoped memory for tpu_custom_call.1']
    #allocation5 [shape = 'u8[131072]{0}', space=vmem, size = 0x20000, scoped, tag = 'input window, operand 1, single buffered']
    #allocation6 [shape = 's32[1]{0}', space=sflag, size = 0x4, scoped, tag = 'scoped memory for tpu_custom_call.1']
    #allocation7 [shape = 'u8[131072]{0}', space=vmem, size = 0x20000, scoped, tag = 'input window, operand 3, single buffered']
    #allocation8 [shape = 'u8[32768]{0}', space=vmem, size = 0x8000, scoped, tag = 'input window, operand 5, single buffered']
    #allocation9 [shape = 's32[1]{0}', space=sflag, size = 0x4, scoped, tag = 'scoped memory for tpu_custom_call.1']
    #allocation10 [shape = 'u8[8192]{0}', space=vmem, size = 0x2000, scoped, tag = 'output window, operand 0, single buffered']
    %12 = vsyncpa [#allocation3], 0
    %13 = vsyncpa [#allocation6], 0
    %14 = vsyncpa [#allocation9], 0
    %15 = vsyncpa [#allocation4], 0
    // Predicated region
    $region2: #{tpu_custom_call.1} parent=1 // pred_check
      _
    $region3: #{tpu_custom_call.1} parent=1 // pred_check_branch
      %17 = sbr.rel (0) target = $region5
    $region4: #{tpu_custom_call.1} parent=1 // pred_region
      %s19 = ssub.s32 1152, 1152
      %20 = vsyncadd [#allocation3], %s19
      %s21 = sshll.u32 [#allocation2], 4
      %s22 = int_to_ptr.vmem [resolvable:$true] %s21
      %27 = dma.hbm_to_vmem [thread:$0]  %s0, 1152, %s22, [#allocation3], 64, 64, 4
    $region5: #{tpu_custom_call.1} parent=1 // pred_fallthru
      _
    // Predicated region
    $region6: #{tpu_custom_call.1} parent=1 // pred_check
      _
    $region7: #{tpu_custom_call.1} parent=1 // pred_check_branch
      %29 = sbr.rel (0) target = $region9
    $region8: #{tpu_custom_call.1} parent=1 // pred_region
      %s31 = ssub.s32 4096, 4096
      %32 = vsyncadd [#allocation6], %s31
      %s33 = sshll.u32 [#allocation5], 4
      %s34 = int_to_ptr.vmem [resolvable:$true] %s33
      %39 = dma.hbm_to_vmem [thread:$0]  %s1, 4096, %s34, [#allocation6], 64, 64, 4
    $region9: #{tpu_custom_call.1} parent=1 // pred_fallthru
      _
    // Predicated region
    $region10: #{tpu_custom_call.1} parent=1 // pred_check
      _
    $region11: #{tpu_custom_call.1} parent=1 // pred_check_branch
      %41 = sbr.rel (0) target = $region13
    $region12: #{tpu_custom_call.1} parent=1 // pred_region
      _
    $region13: #{tpu_custom_call.1} parent=1 // pred_fallthru
      _
    // Predicated region
    $region14: #{tpu_custom_call.1} parent=1 // pred_check
      _
    $region15: #{tpu_custom_call.1} parent=1 // pred_check_branch
      %43 = sbr.rel (0) target = $region17
    $region16: #{tpu_custom_call.1} parent=1 // pred_region
      %s45 = ssub.s32 4096, 4096
      %46 = vsyncadd [#allocation6], %s45
      %s47 = sshll.u32 [#allocation7], 4
      %s48 = int_to_ptr.vmem [resolvable:$true] %s47
      %53 = dma.hbm_to_vmem [thread:$0]  %s3, 4096, %s48, [#allocation6], 64, 64, 4
    $region17: #{tpu_custom_call.1} parent=1 // pred_fallthru
      _
    // Predicated region
    $region18: #{tpu_custom_call.1} parent=1 // pred_check
      _
    $region19: #{tpu_custom_call.1} parent=1 // pred_check_branch
      %55 = sbr.rel (0) target = $region21
    $region20: #{tpu_custom_call.1} parent=1 // pred_region
      _
    $region21: #{tpu_custom_call.1} parent=1 // pred_fallthru
      _
    // Predicated region
    $region22: #{tpu_custom_call.1} parent=1 // pred_check
      _
    $region23: #{tpu_custom_call.1} parent=1 // pred_check_branch
      %57 = sbr.rel (0) target = $region25
    $region24: #{tpu_custom_call.1} parent=1 // pred_region
      %s59 = ssub.s32 1024, 1024
      %60 = vsyncadd [#allocation9], %s59
      %s61 = sshll.u32 [#allocation8], 4
      %s62 = int_to_ptr.vmem [resolvable:$true] %s61
      %67 = dma.hbm_to_vmem [thread:$0]  %s5, 1024, %s62, [#allocation9], 64, 64, 4
    $region25: #{tpu_custom_call.1} parent=1 // pred_fallthru
      _
    // Predicated region
    $region26: #{tpu_custom_call.1} parent=1 // pred_check
      _
    $region27: #{tpu_custom_call.1} parent=1 // pred_check_branch
      %69 = sbr.rel (0) target = $region29
    $region28: #{tpu_custom_call.1} parent=1 // pred_region
      _
    $region29: #{tpu_custom_call.1} parent=1 // pred_fallthru
      _
    // Predicated region
    $region30: #{tpu_custom_call.1} parent=1 // pred_check
      _
    $region31: #{tpu_custom_call.1} parent=1 // pred_check_branch
      %71 = sbr.rel (0) target = $region33
    $region32: #{tpu_custom_call.1} parent=1 // pred_region
      %72 = dma.done [#allocation3], 1152
    $region33: #{tpu_custom_call.1} parent=1 // pred_fallthru
      _
    // Predicated region
    $region34: #{tpu_custom_call.1} parent=1 // pred_check
      _
    $region35: #{tpu_custom_call.1} parent=1 // pred_check_branch
      %74 = sbr.rel (0) target = $region37
    $region36: #{tpu_custom_call.1} parent=1 // pred_region
      %75 = dma.done [#allocation6], 4096
    $region37: #{tpu_custom_call.1} parent=1 // pred_fallthru
      _
    // Predicated region
    $region38: #{tpu_custom_call.1} parent=1 // pred_check
      _
    $region39: #{tpu_custom_call.1} parent=1 // pred_check_branch
      %77 = sbr.rel (0) target = $region41
    $region40: #{tpu_custom_call.1} parent=1 // pred_region
      %78 = dma.done [#allocation6], 4096
    $region41: #{tpu_custom_call.1} parent=1 // pred_fallthru
      _
    // Predicated region
    $region42: #{tpu_custom_call.1} parent=1 // pred_check
      _
    $region43: #{tpu_custom_call.1} parent=1 // pred_check_branch
      %80 = sbr.rel (0) target = $region45
    $region44: #{tpu_custom_call.1} parent=1 // pred_region
      %81 = dma.done [#allocation9], 1024
    $region45: #{tpu_custom_call.1} parent=1 // pred_fallthru
      _
    %v83 = vld [vmem:[%s2] sm:$0x1]
    %v84 = vld [vmem:[%s4] sm:$0x1]
    %v85 = vld [vmem:[#allocation5] sm:$0xf]
    %v86 = vld [vmem:[#allocation5 + $0x4] sm:$0xf]
    %v87 = vld [vmem:[#allocation5 + $0x8] sm:$0xf]
    %v88 = vld [vmem:[#allocation5 + $0xc] sm:$0xf]
    %v89 = vld [vmem:[#allocation5 + $0x10] sm:$0xf]
    %v90 = vld [vmem:[#allocation5 + $0x14] sm:$0xf]
    %v91 = vld [vmem:[#allocation5 + $0x18] sm:$0xf]
    %v92 = vld [vmem:[#allocation5 + $0x1c] sm:$0xf]
    %v93 = vld [vmem:[#allocation5 + $0x20] sm:$0xf]
    %v94 = vld [vmem:[#allocation5 + $0x24] sm:$0xf]
    %v95 = vld [vmem:[#allocation5 + $0x28] sm:$0xf]
    %v96 = vld [vmem:[#allocation5 + $0x2c] sm:$0xf]
    %v97 = vld [vmem:[#allocation5 + $0x30] sm:$0xf]
    %v98 = vld [vmem:[#allocation5 + $0x34] sm:$0xf]
    %v99 = vld [vmem:[#allocation5 + $0x38] sm:$0xf]
    %v100 = vld [vmem:[#allocation5 + $0x3c] sm:$0xf]
    %v101 = vld [vmem:[#allocation5 + $0x40] sm:$0xf]
    %v102 = vld [vmem:[#allocation5 + $0x44] sm:$0xf]
    %v103 = vld [vmem:[#allocation5 + $0x48] sm:$0xf]
    %v104 = vld [vmem:[#allocation5 + $0x4c] sm:$0xf]
    %v105 = vld [vmem:[#allocation5 + $0x50] sm:$0xf]
    %v106 = vld [vmem:[#allocation5 + $0x54] sm:$0xf]
    %v107 = vld [vmem:[#allocation5 + $0x58] sm:$0xf]
    %v108 = vld [vmem:[#allocation5 + $0x5c] sm:$0xf]
    %v109 = vld [vmem:[#allocation5 + $0x60] sm:$0xf]
    %v110 = vld [vmem:[#allocation5 + $0x64] sm:$0xf]
    %v111 = vld [vmem:[#allocation5 + $0x68] sm:$0xf]
    %v112 = vld [vmem:[#allocation5 + $0x6c] sm:$0xf]
    %v113 = vld [vmem:[#allocation5 + $0x70] sm:$0xf]
    %v114 = vld [vmem:[#allocation5 + $0x74] sm:$0xf]
    %v115 = vld [vmem:[#allocation5 + $0x78] sm:$0xf]
    %v116 = vld [vmem:[#allocation5 + $0x7c] sm:$0xf]
    %v117 = vld [vmem:[#allocation5 + $0x80] sm:$0xf]
    %v118 = vld [vmem:[#allocation5 + $0x84] sm:$0xf]
    %v119 = vld [vmem:[#allocation5 + $0x88] sm:$0xf]
    %v120 = vld [vmem:[#allocation5 + $0x8c] sm:$0xf]
    %v121 = vld [vmem:[#allocation5 + $0x90] sm:$0xf]
    %v122 = vld [vmem:[#allocation5 + $0x94] sm:$0xf]
    %v123 = vld [vmem:[#allocation5 + $0x98] sm:$0xf]
    %v124 = vld [vmem:[#allocation5 + $0x9c] sm:$0xf]
    %v125 = vld [vmem:[#allocation5 + $0xa0] sm:$0xf]
    %v126 = vld [vmem:[#allocation5 + $0xa4] sm:$0xf]
    %v127 = vld [vmem:[#allocation5 + $0xa8] sm:$0xf]
    %v128 = vld [vmem:[#allocation5 + $0xac] sm:$0xf]
    %v129 = vld [vmem:[#allocation5 + $0xb0] sm:$0xf]
    %v130 = vld [vmem:[#allocation5 + $0xb4] sm:$0xf]
    %v131 = vld [vmem:[#allocation5 + $0xb8] sm:$0xf]
    %v132 = vld [vmem:[#allocation5 + $0xbc] sm:$0xf]
    %v133 = vld [vmem:[#allocation5 + $0xc0] sm:$0xf]
    %v134 = vld [vmem:[#allocation5 + $0xc4] sm:$0xf]
    %v135 = vld [vmem:[#allocation5 + $0xc8] sm:$0xf]
    %v136 = vld [vmem:[#allocation5 + $0xcc] sm:$0xf]
    %v137 = vld [vmem:[#allocation5 + $0xd0] sm:$0xf]
    %v138 = vld [vmem:[#allocation5 + $0xd4] sm:$0xf]
    %v139 = vld [vmem:[#allocation5 + $0xd8] sm:$0xf]
    %v140 = vld [vmem:[#allocation5 + $0xdc] sm:$0xf]
    %v141 = vld [vmem:[#allocation5 + $0xe0] sm:$0xf]
    %v142 = vld [vmem:[#allocation5 + $0xe4] sm:$0xf]
    %v143 = vld [vmem:[#allocation5 + $0xe8] sm:$0xf]
    %v144 = vld [vmem:[#allocation5 + $0xec] sm:$0xf]
    %v145 = vld [vmem:[#allocation5 + $0xf0] sm:$0xf]
    %v146 = vld [vmem:[#allocation5 + $0xf4] sm:$0xf]
    %v147 = vld [vmem:[#allocation5 + $0xf8] sm:$0xf]
    %v148 = vld [vmem:[#allocation5 + $0xfc] sm:$0xf]
    %v149 = vld [vmem:[#allocation2] sm:$0xf]
    %v150 = vld [vmem:[#allocation2 + $0x4] sm:$0xf]
    %s151 = scalar_lea.vmem [#allocation2], 8
    %v152 = vld [vmem:[%s151] sm:$0xf]
    %v153 = vld [vmem:[%s151 + $0x4] sm:$0xf]
    %s154 = scalar_lea.vmem [#allocation2], 24
    %v155 = vld [vmem:[%s154] sm:$0xf]
    %v156 = vld [vmem:[%s154 + $0x4] sm:$0xf]
    %s157 = scalar_lea.vmem [#allocation2], 32
    %v158 = vld [vmem:[%s157] sm:$0xf]
    %v159 = vld [vmem:[%s157 + $0x4] sm:$0xf]
    %v162 = vunpack.c.l.b16 %v149
    %v163 = vunpack.c.l.b16 %v150
    %v164 = vpack.c.b16 %v163, %v162
    %v168 = vunpack.c.l.b16 %v152
    %v169 = vunpack.c.l.b16 %v153
    %v170 = vpack.c.b16 %v169, %v168
    %v174 = vunpack.c.l.b16 %v155
    %v175 = vunpack.c.l.b16 %v156
    %v176 = vpack.c.b16 %v175, %v174
    %v180 = vunpack.c.l.b16 %v158
    %v181 = vunpack.c.l.b16 %v159
    %v182 = vpack.c.b16 %v181, %v180
    %v185 = vlaneseq
    %v186 = vshrl.u32 %v185, 7
    %v187 = vsub.s32 0, %v186
    %v188 = vrot.slane %v83, %v187
    %v254 = vunpack.c.l.b16 %v85
    %v255 = vunpack.c.l.b16 %v86
    %v256 = vunpack.c.l.b16 %v87
    %v257 = vunpack.c.l.b16 %v88
    %v258 = vunpack.c.l.b16 %v89
    %v259 = vunpack.c.l.b16 %v90
    %v260 = vunpack.c.l.b16 %v91
    %v261 = vunpack.c.l.b16 %v92
    %v262 = vunpack.c.l.b16 %v93
    %v263 = vunpack.c.l.b16 %v94
    %v264 = vunpack.c.l.b16 %v95
    %v265 = vunpack.c.l.b16 %v96
    %v266 = vunpack.c.l.b16 %v97
    %v267 = vunpack.c.l.b16 %v98
    %v268 = vunpack.c.l.b16 %v99
    %v269 = vunpack.c.l.b16 %v100
    %v270 = vunpack.c.l.b16 %v101
    %v271 = vunpack.c.l.b16 %v102
    %v272 = vunpack.c.l.b16 %v103
    %v273 = vunpack.c.l.b16 %v104
    %v274 = vunpack.c.l.b16 %v105
    %v275 = vunpack.c.l.b16 %v106
    %v276 = vunpack.c.l.b16 %v107
    %v277 = vunpack.c.l.b16 %v108
    %v278 = vunpack.c.l.b16 %v109
    %v279 = vunpack.c.l.b16 %v110
    %v280 = vunpack.c.l.b16 %v111
    %v281 = vunpack.c.l.b16 %v112
    %v282 = vunpack.c.l.b16 %v113
    %v283 = vunpack.c.l.b16 %v114
    %v284 = vunpack.c.l.b16 %v115
    %v285 = vunpack.c.l.b16 %v116
    %v286 = vunpack.c.l.b16 %v117
    %v287 = vunpack.c.l.b16 %v118
    %v288 = vunpack.c.l.b16 %v119
    %v289 = vunpack.c.l.b16 %v120
    %v290 = vunpack.c.l.b16 %v121
    %v291 = vunpack.c.l.b16 %v122
    %v292 = vunpack.c.l.b16 %v123
    %v293 = vunpack.c.l.b16 %v124
    %v294 = vunpack.c.l.b16 %v125
    %v295 = vunpack.c.l.b16 %v126
    %v296 = vunpack.c.l.b16 %v127
    %v297 = vunpack.c.l.b16 %v128
    %v298 = vunpack.c.l.b16 %v129
    %v299 = vunpack.c.l.b16 %v130
    %v300 = vunpack.c.l.b16 %v131
    %v301 = vunpack.c.l.b16 %v132
    %v302 = vunpack.c.l.b16 %v133
    %v303 = vunpack.c.l.b16 %v134
    %v304 = vunpack.c.l.b16 %v135
    %v305 = vunpack.c.l.b16 %v136
    %v306 = vunpack.c.l.b16 %v137
    %v307 = vunpack.c.l.b16 %v138
    %v308 = vunpack.c.l.b16 %v139
    %v309 = vunpack.c.l.b16 %v140
    %v310 = vunpack.c.l.b16 %v141
    %v311 = vunpack.c.l.b16 %v142
    %v312 = vunpack.c.l.b16 %v143
    %v313 = vunpack.c.l.b16 %v144
    %v314 = vunpack.c.l.b16 %v145
    %v315 = vunpack.c.l.b16 %v146
    %v316 = vunpack.c.l.b16 %v147
    %v317 = vunpack.c.l.b16 %v148
    %v318 = vpack.c.b16 %v255, %v254
    %v319 = vpack.c.b16 %v257, %v256
    %v320 = vpack.c.b16 %v259, %v258
    %v321 = vpack.c.b16 %v261, %v260
    %v322 = vpack.c.b16 %v263, %v262
    %v323 = vpack.c.b16 %v265, %v264
    %v324 = vpack.c.b16 %v267, %v266
    %v325 = vpack.c.b16 %v269, %v268
    %v326 = vpack.c.b16 %v271, %v270
    %v327 = vpack.c.b16 %v273, %v272
    %v328 = vpack.c.b16 %v275, %v274
    %v329 = vpack.c.b16 %v277, %v276
    %v330 = vpack.c.b16 %v279, %v278
    %v331 = vpack.c.b16 %v281, %v280
    %v332 = vpack.c.b16 %v283, %v282
    %v333 = vpack.c.b16 %v285, %v284
    %v334 = vpack.c.b16 %v287, %v286
    %v335 = vpack.c.b16 %v289, %v288
    %v336 = vpack.c.b16 %v291, %v290
    %v337 = vpack.c.b16 %v293, %v292
    %v338 = vpack.c.b16 %v295, %v294
    %v339 = vpack.c.b16 %v297, %v296
    %v340 = vpack.c.b16 %v299, %v298
    %v341 = vpack.c.b16 %v301, %v300
    %v342 = vpack.c.b16 %v303, %v302
    %v343 = vpack.c.b16 %v305, %v304
    %v344 = vpack.c.b16 %v307, %v306
    %v345 = vpack.c.b16 %v309, %v308
    %v346 = vpack.c.b16 %v311, %v310
    %v347 = vpack.c.b16 %v313, %v312
    %v348 = vpack.c.b16 %v315, %v314
    %v349 = vpack.c.b16 %v317, %v316
    %382 = vmatprep.subr.bf16.mxu0 0
    %383 = vmatpush1.bf16.msra.mxu0 %v318
    %384 = vmatprep.subr.bf16.mxu0 0
    %385 = vmatpush1.bf16.msra.mxu0 %v319
    %386 = vmatprep.subr.bf16.mxu0 0
    %387 = vmatpush1.bf16.msra.mxu0 %v320
    %388 = vmatprep.subr.bf16.mxu0 0
    %389 = vmatpush1.bf16.msra.mxu0 %v321
    %390 = vmatprep.subr.bf16.mxu0 0
    %391 = vmatpush1.bf16.msra.mxu0 %v322
    %392 = vmatprep.subr.bf16.mxu0 0
    %393 = vmatpush1.bf16.msra.mxu0 %v323
    %394 = vmatprep.subr.bf16.mxu0 0
    %395 = vmatpush1.bf16.msra.mxu0 %v324
    %396 = vmatprep.subr.bf16.mxu0 0
    %397 = vmatpush1.bf16.msra.mxu0 %v325
    %398 = vmatprep.subr.bf16.mxu0 0
    %399 = vmatpush1.bf16.msra.mxu0 %v326
    %400 = vmatprep.subr.bf16.mxu0 0
    %401 = vmatpush1.bf16.msra.mxu0 %v327
    %402 = vmatprep.subr.bf16.mxu0 0
    %403 = vmatpush1.bf16.msra.mxu0 %v328
    %404 = vmatprep.subr.bf16.mxu0 0
    %405 = vmatpush1.bf16.msra.mxu0 %v329
    %406 = vmatprep.subr.bf16.mxu0 0
    %407 = vmatpush1.bf16.msra.mxu0 %v330
    %408 = vmatprep.subr.bf16.mxu0 0
    %409 = vmatpush1.bf16.msra.mxu0 %v331
    %410 = vmatprep.subr.bf16.mxu0 0
    %411 = vmatpush1.bf16.msra.mxu0 %v332
    %412 = vmatprep.subr.bf16.mxu0 0
    %413 = vmatpush1.bf16.msra.mxu0 %v333
    %414 = vmatprep.mubr.bf16.mxu0 %v170
    %415 = vmatmul.mubr.bf16.gmra.mrb[0].mxu0 %v164
    %v416 = vpop.f32.mrb[0].mxu0
    %v417 = vadd.f32 %v188, %v416
    %v418 = vpop.f32.mrb[0].mxu0
    %v419 = vpop.f32.mrb[0].mxu0
    %v420 = vadd.f32 %v188, %v419
    %v421 = vpop.f32.mrb[0].mxu0
    %422 = vdwg.mxu0
    %423 = vmatprep.subr.bf16.mxu0 0
    %424 = vmatpush1.bf16.msra.mxu0 %v334
    %425 = vmatprep.subr.bf16.mxu0 0
    %426 = vmatpush1.bf16.msra.mxu0 %v335
    %427 = vmatprep.subr.bf16.mxu0 0
    %428 = vmatpush1.bf16.msra.mxu0 %v336
    %429 = vmatprep.subr.bf16.mxu0 0
    %430 = vmatpush1.bf16.msra.mxu0 %v337
    %431 = vmatprep.subr.bf16.mxu0 0
    %432 = vmatpush1.bf16.msra.mxu0 %v338
    %433 = vmatprep.subr.bf16.mxu0 0
    %434 = vmatpush1.bf16.msra.mxu0 %v339
    %435 = vmatprep.subr.bf16.mxu0 0
    %436 = vmatpush1.bf16.msra.mxu0 %v340
    %437 = vmatprep.subr.bf16.mxu0 0
    %438 = vmatpush1.bf16.msra.mxu0 %v341
    %439 = vmatprep.subr.bf16.mxu0 0
    %440 = vmatpush1.bf16.msra.mxu0 %v342
    %441 = vmatprep.subr.bf16.mxu0 0
    %442 = vmatpush1.bf16.msra.mxu0 %v343
    %443 = vmatprep.subr.bf16.mxu0 0
    %444 = vmatpush1.bf16.msra.mxu0 %v344
    %445 = vmatprep.subr.bf16.mxu0 0
    %446 = vmatpush1.bf16.msra.mxu0 %v345
    %447 = vmatprep.subr.bf16.mxu0 0
    %448 = vmatpush1.bf16.msra.mxu0 %v346
    %449 = vmatprep.subr.bf16.mxu0 0
    %450 = vmatpush1.bf16.msra.mxu0 %v347
    %451 = vmatprep.subr.bf16.mxu0 0
    %452 = vmatpush1.bf16.msra.mxu0 %v348
    %453 = vmatprep.subr.bf16.mxu0 0
    %454 = vmatpush1.bf16.msra.mxu0 %v349
    %455 = vmatprep.mubr.bf16.mxu0 %v182
    %456 = vmatmul.mubr.bf16.gmra.mrb[0].mxu0 %v176
    %v457 = vpop.f32.mrb[0].mxu0
    %v458 = vadd.f32 %v417, %v457
    %v459 = vpop.f32.mrb[0].mxu0
    %v460 = vpop.f32.mrb[0].mxu0
    %v461 = vadd.f32 %v420, %v460
    %v462 = vpop.f32.mrb[0].mxu0
    %463 = vdwg.mxu0
    %v464 = vmax.f32 %v458, 0.0
    %v465 = vmax.f32 %v461, 0.0
    %v466 = vpack.c.bf16 %v465, %v464
    %s467 = scalar_lea.vmem [#allocation2], 16
    %v468 = vld [vmem:[%s467] sm:$0xf]
    %v469 = vld [vmem:[%s467 + $0x4] sm:$0xf]
    %s470 = scalar_lea.vmem [#allocation2], 40
    %v471 = vld [vmem:[%s470] sm:$0xf]
    %v472 = vld [vmem:[%s470 + $0x4] sm:$0xf]
    %v475 = vunpack.c.l.b16 %v468
    %v476 = vunpack.c.l.b16 %v469
    %v477 = vpack.c.b16 %v476, %v475
    %v481 = vunpack.c.l.b16 %v471
    %v482 = vunpack.c.l.b16 %v472
    %v483 = vpack.c.b16 %v482, %v481
    %485 = vmatprep.subr.bf16.mxu0 0
    %486 = vmatpush1.bf16.msra.mxu0 %v318
    %487 = vmatprep.subr.bf16.mxu0 0
    %488 = vmatpush1.bf16.msra.mxu0 %v319
    %489 = vmatprep.subr.bf16.mxu0 0
    %490 = vmatpush1.bf16.msra.mxu0 %v320
    %491 = vmatprep.subr.bf16.mxu0 0
    %492 = vmatpush1.bf16.msra.mxu0 %v321
    %493 = vmatprep.subr.bf16.mxu0 0
    %494 = vmatpush1.bf16.msra.mxu0 %v322
    %495 = vmatprep.subr.bf16.mxu0 0
    %496 = vmatpush1.bf16.msra.mxu0 %v323
    %497 = vmatprep.subr.bf16.mxu0 0
    %498 = vmatpush1.bf16.msra.mxu0 %v324
    %499 = vmatprep.subr.bf16.mxu0 0
    %500 = vmatpush1.bf16.msra.mxu0 %v325
    %501 = vmatprep.subr.bf16.mxu0 0
    %502 = vmatpush1.bf16.msra.mxu0 %v326
    %503 = vmatprep.subr.bf16.mxu0 0
    %504 = vmatpush1.bf16.msra.mxu0 %v327
    %505 = vmatprep.subr.bf16.mxu0 0
    %506 = vmatpush1.bf16.msra.mxu0 %v328
    %507 = vmatprep.subr.bf16.mxu0 0
    %508 = vmatpush1.bf16.msra.mxu0 %v329
    %509 = vmatprep.subr.bf16.mxu0 0
    %510 = vmatpush1.bf16.msra.mxu0 %v330
    %511 = vmatprep.subr.bf16.mxu0 0
    %512 = vmatpush1.bf16.msra.mxu0 %v331
    %513 = vmatprep.subr.bf16.mxu0 0
    %514 = vmatpush1.bf16.msra.mxu0 %v332
    %515 = vmatprep.subr.bf16.mxu0 0
    %516 = vmatpush1.bf16.msra.mxu0 %v333
    %517 = vmatprep.mubr.bf16.mxu0 %v477
    %518 = vmatmul.mubr.bf16.gmra.mrb[0].mxu0 %v170
    %v519 = vpop.f32.mrb[0].mxu0
    %v520 = vadd.f32 %v188, %v519
    %v521 = vpop.f32.mrb[0].mxu0
    %v522 = vpop.f32.mrb[0].mxu0
    %v523 = vadd.f32 %v188, %v522
    %v524 = vpop.f32.mrb[0].mxu0
    %525 = vdwg.mxu0
    %526 = vmatprep.subr.bf16.mxu0 0
    %527 = vmatpush1.bf16.msra.mxu0 %v334
    %528 = vmatprep.subr.bf16.mxu0 0
    %529 = vmatpush1.bf16.msra.mxu0 %v335
    %530 = vmatprep.subr.bf16.mxu0 0
    %531 = vmatpush1.bf16.msra.mxu0 %v336
    %532 = vmatprep.subr.bf16.mxu0 0
    %533 = vmatpush1.bf16.msra.mxu0 %v337
    %534 = vmatprep.subr.bf16.mxu0 0
    %535 = vmatpush1.bf16.msra.mxu0 %v338
    %536 = vmatprep.subr.bf16.mxu0 0
    %537 = vmatpush1.bf16.msra.mxu0 %v339
    %538 = vmatprep.subr.bf16.mxu0 0
    %539 = vmatpush1.bf16.msra.mxu0 %v340
    %540 = vmatprep.subr.bf16.mxu0 0
    %541 = vmatpush1.bf16.msra.mxu0 %v341
    %542 = vmatprep.subr.bf16.mxu0 0
    %543 = vmatpush1.bf16.msra.mxu0 %v342
    %544 = vmatprep.subr.bf16.mxu0 0
    %545 = vmatpush1.bf16.msra.mxu0 %v343
    %546 = vmatprep.subr.bf16.mxu0 0
    %547 = vmatpush1.bf16.msra.mxu0 %v344
    %548 = vmatprep.subr.bf16.mxu0 0
    %549 = vmatpush1.bf16.msra.mxu0 %v345
    %550 = vmatprep.subr.bf16.mxu0 0
    %551 = vmatpush1.bf16.msra.mxu0 %v346
    %552 = vmatprep.subr.bf16.mxu0 0
    %553 = vmatpush1.bf16.msra.mxu0 %v347
    %554 = vmatprep.subr.bf16.mxu0 0
    %555 = vmatpush1.bf16.msra.mxu0 %v348
    %556 = vmatprep.subr.bf16.mxu0 0
    %557 = vmatpush1.bf16.msra.mxu0 %v349
    %558 = vmatprep.mubr.bf16.mxu0 %v483
    %559 = vmatmul.mubr.bf16.gmra.mrb[0].mxu0 %v182
    %v560 = vpop.f32.mrb[0].mxu0
    %v561 = vadd.f32 %v520, %v560
    %v562 = vpop.f32.mrb[0].mxu0
    %v563 = vpop.f32.mrb[0].mxu0
    %v564 = vadd.f32 %v523, %v563
    %v565 = vpop.f32.mrb[0].mxu0
    %566 = vdwg.mxu0
    %v567 = vmax.f32 %v561, 0.0
    %v568 = vmax.f32 %v564, 0.0
    %v569 = vpack.c.bf16 %v568, %v567
    %s570 = scalar_lea.vmem [#allocation2], 48
    %v571 = vld [vmem:[%s570] sm:$0xf]
    %v572 = vld [vmem:[%s570 + $0x4] sm:$0xf]
    %s573 = scalar_lea.vmem [#allocation2], 56
    %v574 = vld [vmem:[%s573] sm:$0xf]
    %v575 = vld [vmem:[%s573 + $0x4] sm:$0xf]
    %v578 = vunpack.c.l.b16 %v571
    %v579 = vunpack.c.l.b16 %v572
    %v580 = vpack.c.b16 %v579, %v578
    %v584 = vunpack.c.l.b16 %v574
    %v585 = vunpack.c.l.b16 %v575
    %v586 = vpack.c.b16 %v585, %v584
    %588 = vmatprep.subr.bf16.mxu0 0
    %589 = vmatpush1.bf16.msra.mxu0 %v318
    %590 = vmatprep.subr.bf16.mxu0 0
    %591 = vmatpush1.bf16.msra.mxu0 %v319
    %592 = vmatprep.subr.bf16.mxu0 0
    %593 = vmatpush1.bf16.msra.mxu0 %v320
    %594 = vmatprep.subr.bf16.mxu0 0
    %595 = vmatpush1.bf16.msra.mxu0 %v321
    %596 = vmatprep.subr.bf16.mxu0 0
    %597 = vmatpush1.bf16.msra.mxu0 %v322
    %598 = vmatprep.subr.bf16.mxu0 0
    %599 = vmatpush1.bf16.msra.mxu0 %v323
    %600 = vmatprep.subr.bf16.mxu0 0
    %601 = vmatpush1.bf16.msra.mxu0 %v324
    %602 = vmatprep.subr.bf16.mxu0 0
    %603 = vmatpush1.bf16.msra.mxu0 %v325
    %604 = vmatprep.subr.bf16.mxu0 0
    %605 = vmatpush1.bf16.msra.mxu0 %v326
    %606 = vmatprep.subr.bf16.mxu0 0
    %607 = vmatpush1.bf16.msra.mxu0 %v327
    %608 = vmatprep.subr.bf16.mxu0 0
    %609 = vmatpush1.bf16.msra.mxu0 %v328
    %610 = vmatprep.subr.bf16.mxu0 0
    %611 = vmatpush1.bf16.msra.mxu0 %v329
    %612 = vmatprep.subr.bf16.mxu0 0
    %613 = vmatpush1.bf16.msra.mxu0 %v330
    %614 = vmatprep.subr.bf16.mxu0 0
    %615 = vmatpush1.bf16.msra.mxu0 %v331
    %616 = vmatprep.subr.bf16.mxu0 0
    %617 = vmatpush1.bf16.msra.mxu0 %v332
    %618 = vmatprep.subr.bf16.mxu0 0
    %619 = vmatpush1.bf16.msra.mxu0 %v333
    %620 = vmatprep.mubr.bf16.mxu0 %v182
    %621 = vmatmul.mubr.bf16.gmra.mrb[0].mxu0 %v176
    %v622 = vpop.f32.mrb[0].mxu0
    %v623 = vadd.f32 %v188, %v622
    %v624 = vpop.f32.mrb[0].mxu0
    %v625 = vpop.f32.mrb[0].mxu0
    %v626 = vadd.f32 %v188, %v625
    %v627 = vpop.f32.mrb[0].mxu0
    %628 = vdwg.mxu0
    %629 = vmatprep.subr.bf16.mxu0 0
    %630 = vmatpush1.bf16.msra.mxu0 %v334
    %631 = vmatprep.subr.bf16.mxu0 0
    %632 = vmatpush1.bf16.msra.mxu0 %v335
    %633 = vmatprep.subr.bf16.mxu0 0
    %634 = vmatpush1.bf16.msra.mxu0 %v336
    %635 = vmatprep.subr.bf16.mxu0 0
    %636 = vmatpush1.bf16.msra.mxu0 %v337
    %637 = vmatprep.subr.bf16.mxu0 0
    %638 = vmatpush1.bf16.msra.mxu0 %v338
    %639 = vmatprep.subr.bf16.mxu0 0
    %640 = vmatpush1.bf16.msra.mxu0 %v339
    %641 = vmatprep.subr.bf16.mxu0 0
    %642 = vmatpush1.bf16.msra.mxu0 %v340
    %643 = vmatprep.subr.bf16.mxu0 0
    %644 = vmatpush1.bf16.msra.mxu0 %v341
    %645 = vmatprep.subr.bf16.mxu0 0
    %646 = vmatpush1.bf16.msra.mxu0 %v342
    %647 = vmatprep.subr.bf16.mxu0 0
    %648 = vmatpush1.bf16.msra.mxu0 %v343
    %649 = vmatprep.subr.bf16.mxu0 0
    %650 = vmatpush1.bf16.msra.mxu0 %v344
    %651 = vmatprep.subr.bf16.mxu0 0
    %652 = vmatpush1.bf16.msra.mxu0 %v345
    %653 = vmatprep.subr.bf16.mxu0 0
    %654 = vmatpush1.bf16.msra.mxu0 %v346
    %655 = vmatprep.subr.bf16.mxu0 0
    %656 = vmatpush1.bf16.msra.mxu0 %v347
    %657 = vmatprep.subr.bf16.mxu0 0
    %658 = vmatpush1.bf16.msra.mxu0 %v348
    %659 = vmatprep.subr.bf16.mxu0 0
    %660 = vmatpush1.bf16.msra.mxu0 %v349
    %661 = vmatprep.mubr.bf16.mxu0 %v586
    %662 = vmatmul.mubr.bf16.gmra.mrb[0].mxu0 %v580
    %v663 = vpop.f32.mrb[0].mxu0
    %v664 = vadd.f32 %v623, %v663
    %v665 = vpop.f32.mrb[0].mxu0
    %v666 = vpop.f32.mrb[0].mxu0
    %v667 = vadd.f32 %v626, %v666
    %v668 = vpop.f32.mrb[0].mxu0
    %669 = vdwg.mxu0
    %v670 = vmax.f32 %v664, 0.0
    %v671 = vmax.f32 %v667, 0.0
    %v672 = vpack.c.bf16 %v671, %v670
    %s673 = scalar_lea.vmem [#allocation2], 64
    %v674 = vld [vmem:[%s673] sm:$0xf]
    %v675 = vld [vmem:[%s673 + $0x4] sm:$0xf]
    %v678 = vunpack.c.l.b16 %v674
    %v679 = vunpack.c.l.b16 %v675
    %v680 = vpack.c.b16 %v679, %v678
    %682 = vmatprep.subr.bf16.mxu0 0
    %683 = vmatpush1.bf16.msra.mxu0 %v318
    %684 = vmatprep.subr.bf16.mxu0 0
    %685 = vmatpush1.bf16.msra.mxu0 %v319
    %686 = vmatprep.subr.bf16.mxu0 0
    %687 = vmatpush1.bf16.msra.mxu0 %v320
    %688 = vmatprep.subr.bf16.mxu0 0
    %689 = vmatpush1.bf16.msra.mxu0 %v321
    %690 = vmatprep.subr.bf16.mxu0 0
    %691 = vmatpush1.bf16.msra.mxu0 %v322
    %692 = vmatprep.subr.bf16.mxu0 0
    %693 = vmatpush1.bf16.msra.mxu0 %v323
    %694 = vmatprep.subr.bf16.mxu0 0
    %695 = vmatpush1.bf16.msra.mxu0 %v324
    %696 = vmatprep.subr.bf16.mxu0 0
    %697 = vmatpush1.bf16.msra.mxu0 %v325
    %698 = vmatprep.subr.bf16.mxu0 0
    %699 = vmatpush1.bf16.msra.mxu0 %v326
    %700 = vmatprep.subr.bf16.mxu0 0
    %701 = vmatpush1.bf16.msra.mxu0 %v327
    %702 = vmatprep.subr.bf16.mxu0 0
    %703 = vmatpush1.bf16.msra.mxu0 %v328
    %704 = vmatprep.subr.bf16.mxu0 0
    %705 = vmatpush1.bf16.msra.mxu0 %v329
    %706 = vmatprep.subr.bf16.mxu0 0
    %707 = vmatpush1.bf16.msra.mxu0 %v330
    %708 = vmatprep.subr.bf16.mxu0 0
    %709 = vmatpush1.bf16.msra.mxu0 %v331
    %710 = vmatprep.subr.bf16.mxu0 0
    %711 = vmatpush1.bf16.msra.mxu0 %v332
    %712 = vmatprep.subr.bf16.mxu0 0
    %713 = vmatpush1.bf16.msra.mxu0 %v333
    %714 = vmatprep.mubr.bf16.mxu0 %v483
    %715 = vmatmul.mubr.bf16.gmra.mrb[0].mxu0 %v182
    %v716 = vpop.f32.mrb[0].mxu0
    %v717 = vadd.f32 %v188, %v716
    %v718 = vpop.f32.mrb[0].mxu0
    %v719 = vpop.f32.mrb[0].mxu0
    %v720 = vadd.f32 %v188, %v719
    %v721 = vpop.f32.mrb[0].mxu0
    %722 = vdwg.mxu0
    %723 = vmatprep.subr.bf16.mxu0 0
    %724 = vmatpush1.bf16.msra.mxu0 %v334
    %725 = vmatprep.subr.bf16.mxu0 0
    %726 = vmatpush1.bf16.msra.mxu0 %v335
    %727 = vmatprep.subr.bf16.mxu0 0
    %728 = vmatpush1.bf16.msra.mxu0 %v336
    %729 = vmatprep.subr.bf16.mxu0 0
    %730 = vmatpush1.bf16.msra.mxu0 %v337
    %731 = vmatprep.subr.bf16.mxu0 0
    %732 = vmatpush1.bf16.msra.mxu0 %v338
    %733 = vmatprep.subr.bf16.mxu0 0
    %734 = vmatpush1.bf16.msra.mxu0 %v339
    %735 = vmatprep.subr.bf16.mxu0 0
    %736 = vmatpush1.bf16.msra.mxu0 %v340
    %737 = vmatprep.subr.bf16.mxu0 0
    %738 = vmatpush1.bf16.msra.mxu0 %v341
    %739 = vmatprep.subr.bf16.mxu0 0
    %740 = vmatpush1.bf16.msra.mxu0 %v342
    %741 = vmatprep.subr.bf16.mxu0 0
    %742 = vmatpush1.bf16.msra.mxu0 %v343
    %743 = vmatprep.subr.bf16.mxu0 0
    %744 = vmatpush1.bf16.msra.mxu0 %v344
    %745 = vmatprep.subr.bf16.mxu0 0
    %746 = vmatpush1.bf16.msra.mxu0 %v345
    %747 = vmatprep.subr.bf16.mxu0 0
    %748 = vmatpush1.bf16.msra.mxu0 %v346
    %749 = vmatprep.subr.bf16.mxu0 0
    %750 = vmatpush1.bf16.msra.mxu0 %v347
    %751 = vmatprep.subr.bf16.mxu0 0
    %752 = vmatpush1.bf16.msra.mxu0 %v348
    %753 = vmatprep.subr.bf16.mxu0 0
    %754 = vmatpush1.bf16.msra.mxu0 %v349
    %755 = vmatprep.mubr.bf16.mxu0 %v680
    %756 = vmatmul.mubr.bf16.gmra.mrb[0].mxu0 %v586
    %v757 = vpop.f32.mrb[0].mxu0
    %v758 = vadd.f32 %v717, %v757
    %v759 = vpop.f32.mrb[0].mxu0
    %v760 = vpop.f32.mrb[0].mxu0
    %v761 = vadd.f32 %v720, %v760
    %v762 = vpop.f32.mrb[0].mxu0
    %763 = vdwg.mxu0
    %v764 = vmax.f32 %v758, 0.0
    %v765 = vmax.f32 %v761, 0.0
    %v766 = vpack.c.bf16 %v765, %v764
    %v767 = vld [vmem:[#allocation7] sm:$0xf]
    %v768 = vld [vmem:[#allocation7 + $0x4] sm:$0xf]
    %v769 = vld [vmem:[#allocation7 + $0x8] sm:$0xf]
    %v770 = vld [vmem:[#allocation7 + $0xc] sm:$0xf]
    %v771 = vld [vmem:[#allocation7 + $0x10] sm:$0xf]
    %v772 = vld [vmem:[#allocation7 + $0x14] sm:$0xf]
    %v773 = vld [vmem:[#allocation7 + $0x18] sm:$0xf]
    %v774 = vld [vmem:[#allocation7 + $0x1c] sm:$0xf]
    %v775 = vld [vmem:[#allocation7 + $0x20] sm:$0xf]
    %v776 = vld [vmem:[#allocation7 + $0x24] sm:$0xf]
    %v777 = vld [vmem:[#allocation7 + $0x28] sm:$0xf]
    %v778 = vld [vmem:[#allocation7 + $0x2c] sm:$0xf]
    %v779 = vld [vmem:[#allocation7 + $0x30] sm:$0xf]
    %v780 = vld [vmem:[#allocation7 + $0x34] sm:$0xf]
    %v781 = vld [vmem:[#allocation7 + $0x38] sm:$0xf]
    %v782 = vld [vmem:[#allocation7 + $0x3c] sm:$0xf]
    %v783 = vld [vmem:[#allocation7 + $0x40] sm:$0xf]
    %v784 = vld [vmem:[#allocation7 + $0x44] sm:$0xf]
    %v785 = vld [vmem:[#allocation7 + $0x48] sm:$0xf]
    %v786 = vld [vmem:[#allocation7 + $0x4c] sm:$0xf]
    %v787 = vld [vmem:[#allocation7 + $0x50] sm:$0xf]
    %v788 = vld [vmem:[#allocation7 + $0x54] sm:$0xf]
    %v789 = vld [vmem:[#allocation7 + $0x58] sm:$0xf]
    %v790 = vld [vmem:[#allocation7 + $0x5c] sm:$0xf]
    %v791 = vld [vmem:[#allocation7 + $0x60] sm:$0xf]
    %v792 = vld [vmem:[#allocation7 + $0x64] sm:$0xf]
    %v793 = vld [vmem:[#allocation7 + $0x68] sm:$0xf]
    %v794 = vld [vmem:[#allocation7 + $0x6c] sm:$0xf]
    %v795 = vld [vmem:[#allocation7 + $0x70] sm:$0xf]
    %v796 = vld [vmem:[#allocation7 + $0x74] sm:$0xf]
    %v797 = vld [vmem:[#allocation7 + $0x78] sm:$0xf]
    %v798 = vld [vmem:[#allocation7 + $0x7c] sm:$0xf]
    %v799 = vld [vmem:[#allocation7 + $0x80] sm:$0xf]
    %v800 = vld [vmem:[#allocation7 + $0x84] sm:$0xf]
    %v801 = vld [vmem:[#allocation7 + $0x88] sm:$0xf]
    %v802 = vld [vmem:[#allocation7 + $0x8c] sm:$0xf]
    %v803 = vld [vmem:[#allocation7 + $0x90] sm:$0xf]
    %v804 = vld [vmem:[#allocation7 + $0x94] sm:$0xf]
    %v805 = vld [vmem:[#allocation7 + $0x98] sm:$0xf]
    %v806 = vld [vmem:[#allocation7 + $0x9c] sm:$0xf]
    %v807 = vld [vmem:[#allocation7 + $0xa0] sm:$0xf]
    %v808 = vld [vmem:[#allocation7 + $0xa4] sm:$0xf]
    %v809 = vld [vmem:[#allocation7 + $0xa8] sm:$0xf]
    %v810 = vld [vmem:[#allocation7 + $0xac] sm:$0xf]
    %v811 = vld [vmem:[#allocation7 + $0xb0] sm:$0xf]
    %v812 = vld [vmem:[#allocation7 + $0xb4] sm:$0xf]
    %v813 = vld [vmem:[#allocation7 + $0xb8] sm:$0xf]
    %v814 = vld [vmem:[#allocation7 + $0xbc] sm:$0xf]
    %v815 = vld [vmem:[#allocation7 + $0xc0] sm:$0xf]
    %v816 = vld [vmem:[#allocation7 + $0xc4] sm:$0xf]
    %v817 = vld [vmem:[#allocation7 + $0xc8] sm:$0xf]
    %v818 = vld [vmem:[#allocation7 + $0xcc] sm:$0xf]
    %v819 = vld [vmem:[#allocation7 + $0xd0] sm:$0xf]
    %v820 = vld [vmem:[#allocation7 + $0xd4] sm:$0xf]
    %v821 = vld [vmem:[#allocation7 + $0xd8] sm:$0xf]
    %v822 = vld [vmem:[#allocation7 + $0xdc] sm:$0xf]
    %v823 = vld [vmem:[#allocation7 + $0xe0] sm:$0xf]
    %v824 = vld [vmem:[#allocation7 + $0xe4] sm:$0xf]
    %v825 = vld [vmem:[#allocation7 + $0xe8] sm:$0xf]
    %v826 = vld [vmem:[#allocation7 + $0xec] sm:$0xf]
    %v827 = vld [vmem:[#allocation7 + $0xf0] sm:$0xf]
    %v828 = vld [vmem:[#allocation7 + $0xf4] sm:$0xf]
    %v829 = vld [vmem:[#allocation7 + $0xf8] sm:$0xf]
    %v830 = vld [vmem:[#allocation7 + $0xfc] sm:$0xf]
    %v832 = vlaneseq
    %v833 = vshrl.u32 %v832, 7
    %v834 = vsub.s32 0, %v833
    %v835 = vrot.slane %v84, %v834
    %v901 = vunpack.c.l.b16 %v767
    %v902 = vunpack.c.l.b16 %v768
    %v903 = vunpack.c.l.b16 %v769
    %v904 = vunpack.c.l.b16 %v770
    %v905 = vunpack.c.l.b16 %v771
    %v906 = vunpack.c.l.b16 %v772
    %v907 = vunpack.c.l.b16 %v773
    %v908 = vunpack.c.l.b16 %v774
    %v909 = vunpack.c.l.b16 %v775
    %v910 = vunpack.c.l.b16 %v776
    %v911 = vunpack.c.l.b16 %v777
    %v912 = vunpack.c.l.b16 %v778
    %v913 = vunpack.c.l.b16 %v779
    %v914 = vunpack.c.l.b16 %v780
    %v915 = vunpack.c.l.b16 %v781
    %v916 = vunpack.c.l.b16 %v782
    %v917 = vunpack.c.l.b16 %v783
    %v918 = vunpack.c.l.b16 %v784
    %v919 = vunpack.c.l.b16 %v785
    %v920 = vunpack.c.l.b16 %v786
    %v921 = vunpack.c.l.b16 %v787
    %v922 = vunpack.c.l.b16 %v788
    %v923 = vunpack.c.l.b16 %v789
    %v924 = vunpack.c.l.b16 %v790
    %v925 = vunpack.c.l.b16 %v791
    %v926 = vunpack.c.l.b16 %v792
    %v927 = vunpack.c.l.b16 %v793
    %v928 = vunpack.c.l.b16 %v794
    %v929 = vunpack.c.l.b16 %v795
    %v930 = vunpack.c.l.b16 %v796
    %v931 = vunpack.c.l.b16 %v797
    %v932 = vunpack.c.l.b16 %v798
    %v933 = vunpack.c.l.b16 %v799
    %v934 = vunpack.c.l.b16 %v800
    %v935 = vunpack.c.l.b16 %v801
    %v936 = vunpack.c.l.b16 %v802
    %v937 = vunpack.c.l.b16 %v803
    %v938 = vunpack.c.l.b16 %v804
    %v939 = vunpack.c.l.b16 %v805
    %v940 = vunpack.c.l.b16 %v806
    %v941 = vunpack.c.l.b16 %v807
    %v942 = vunpack.c.l.b16 %v808
    %v943 = vunpack.c.l.b16 %v809
    %v944 = vunpack.c.l.b16 %v810
    %v945 = vunpack.c.l.b16 %v811
    %v946 = vunpack.c.l.b16 %v812
    %v947 = vunpack.c.l.b16 %v813
    %v948 = vunpack.c.l.b16 %v814
    %v949 = vunpack.c.l.b16 %v815
    %v950 = vunpack.c.l.b16 %v816
    %v951 = vunpack.c.l.b16 %v817
    %v952 = vunpack.c.l.b16 %v818
    %v953 = vunpack.c.l.b16 %v819
    %v954 = vunpack.c.l.b16 %v820
    %v955 = vunpack.c.l.b16 %v821
    %v956 = vunpack.c.l.b16 %v822
    %v957 = vunpack.c.l.b16 %v823
    %v958 = vunpack.c.l.b16 %v824
    %v959 = vunpack.c.l.b16 %v825
    %v960 = vunpack.c.l.b16 %v826
    %v961 = vunpack.c.l.b16 %v827
    %v962 = vunpack.c.l.b16 %v828
    %v963 = vunpack.c.l.b16 %v829
    %v964 = vunpack.c.l.b16 %v830
    %v965 = vpack.c.b16 %v902, %v901
    %v966 = vpack.c.b16 %v904, %v903
    %v967 = vpack.c.b16 %v906, %v905
    %v968 = vpack.c.b16 %v908, %v907
    %v969 = vpack.c.b16 %v910, %v909
    %v970 = vpack.c.b16 %v912, %v911
    %v971 = vpack.c.b16 %v914, %v913
    %v972 = vpack.c.b16 %v916, %v915
    %v973 = vpack.c.b16 %v918, %v917
    %v974 = vpack.c.b16 %v920, %v919
    %v975 = vpack.c.b16 %v922, %v921
    %v976 = vpack.c.b16 %v924, %v923
    %v977 = vpack.c.b16 %v926, %v925
    %v978 = vpack.c.b16 %v928, %v927
    %v979 = vpack.c.b16 %v930, %v929
    %v980 = vpack.c.b16 %v932, %v931
    %v981 = vpack.c.b16 %v934, %v933
    %v982 = vpack.c.b16 %v936, %v935
    %v983 = vpack.c.b16 %v938, %v937
    %v984 = vpack.c.b16 %v940, %v939
    %v985 = vpack.c.b16 %v942, %v941
    %v986 = vpack.c.b16 %v944, %v943
    %v987 = vpack.c.b16 %v946, %v945
    %v988 = vpack.c.b16 %v948, %v947
    %v989 = vpack.c.b16 %v950, %v949
    %v990 = vpack.c.b16 %v952, %v951
    %v991 = vpack.c.b16 %v954, %v953
    %v992 = vpack.c.b16 %v956, %v955
    %v993 = vpack.c.b16 %v958, %v957
    %v994 = vpack.c.b16 %v960, %v959
    %v995 = vpack.c.b16 %v962, %v961
    %v996 = vpack.c.b16 %v964, %v963
    %1029 = vmatprep.subr.bf16.mxu0 0
    %1030 = vmatpush1.bf16.msra.mxu0 %v965
    %1031 = vmatprep.subr.bf16.mxu0 0
    %1032 = vmatpush1.bf16.msra.mxu0 %v966
    %1033 = vmatprep.subr.bf16.mxu0 0
    %1034 = vmatpush1.bf16.msra.mxu0 %v967
    %1035 = vmatprep.subr.bf16.mxu0 0
    %1036 = vmatpush1.bf16.msra.mxu0 %v968
    %1037 = vmatprep.subr.bf16.mxu0 0
    %1038 = vmatpush1.bf16.msra.mxu0 %v969
    %1039 = vmatprep.subr.bf16.mxu0 0
    %1040 = vmatpush1.bf16.msra.mxu0 %v970
    %1041 = vmatprep.subr.bf16.mxu0 0
    %1042 = vmatpush1.bf16.msra.mxu0 %v971
    %1043 = vmatprep.subr.bf16.mxu0 0
    %1044 = vmatpush1.bf16.msra.mxu0 %v972
    %1045 = vmatprep.subr.bf16.mxu0 0
    %1046 = vmatpush1.bf16.msra.mxu0 %v973
    %1047 = vmatprep.subr.bf16.mxu0 0
    %1048 = vmatpush1.bf16.msra.mxu0 %v974
    %1049 = vmatprep.subr.bf16.mxu0 0
    %1050 = vmatpush1.bf16.msra.mxu0 %v975
    %1051 = vmatprep.subr.bf16.mxu0 0
    %1052 = vmatpush1.bf16.msra.mxu0 %v976
    %1053 = vmatprep.subr.bf16.mxu0 0
    %1054 = vmatpush1.bf16.msra.mxu0 %v977
    %1055 = vmatprep.subr.bf16.mxu0 0
    %1056 = vmatpush1.bf16.msra.mxu0 %v978
    %1057 = vmatprep.subr.bf16.mxu0 0
    %1058 = vmatpush1.bf16.msra.mxu0 %v979
    %1059 = vmatprep.subr.bf16.mxu0 0
    %1060 = vmatpush1.bf16.msra.mxu0 %v980
    %1061 = vmatprep.mubr.bf16.mxu0 %v569
    %1062 = vmatmul.mubr.bf16.gmra.mrb[0].mxu0 %v466
    %v1063 = vpop.f32.mrb[0].mxu0
    %v1064 = vadd.f32 %v835, %v1063
    %v1065 = vpop.f32.mrb[0].mxu0
    %v1066 = vpop.f32.mrb[0].mxu0
    %v1067 = vadd.f32 %v835, %v1066
    %v1068 = vpop.f32.mrb[0].mxu0
    %1069 = vdwg.mxu0
    %1070 = vmatprep.subr.bf16.mxu0 0
    %1071 = vmatpush1.bf16.msra.mxu0 %v981
    %1072 = vmatprep.subr.bf16.mxu0 0
    %1073 = vmatpush1.bf16.msra.mxu0 %v982
    %1074 = vmatprep.subr.bf16.mxu0 0
    %1075 = vmatpush1.bf16.msra.mxu0 %v983
    %1076 = vmatprep.subr.bf16.mxu0 0
    %1077 = vmatpush1.bf16.msra.mxu0 %v984
    %1078 = vmatprep.subr.bf16.mxu0 0
    %1079 = vmatpush1.bf16.msra.mxu0 %v985
    %1080 = vmatprep.subr.bf16.mxu0 0
    %1081 = vmatpush1.bf16.msra.mxu0 %v986
    %1082 = vmatprep.subr.bf16.mxu0 0
    %1083 = vmatpush1.bf16.msra.mxu0 %v987
    %1084 = vmatprep.subr.bf16.mxu0 0
    %1085 = vmatpush1.bf16.msra.mxu0 %v988
    %1086 = vmatprep.subr.bf16.mxu0 0
    %1087 = vmatpush1.bf16.msra.mxu0 %v989
    %1088 = vmatprep.subr.bf16.mxu0 0
    %1089 = vmatpush1.bf16.msra.mxu0 %v990
    %1090 = vmatprep.subr.bf16.mxu0 0
    %1091 = vmatpush1.bf16.msra.mxu0 %v991
    %1092 = vmatprep.subr.bf16.mxu0 0
    %1093 = vmatpush1.bf16.msra.mxu0 %v992
    %1094 = vmatprep.subr.bf16.mxu0 0
    %1095 = vmatpush1.bf16.msra.mxu0 %v993
    %1096 = vmatprep.subr.bf16.mxu0 0
    %1097 = vmatpush1.bf16.msra.mxu0 %v994
    %1098 = vmatprep.subr.bf16.mxu0 0
    %1099 = vmatpush1.bf16.msra.mxu0 %v995
    %1100 = vmatprep.subr.bf16.mxu0 0
    %1101 = vmatpush1.bf16.msra.mxu0 %v996
    %1102 = vmatprep.mubr.bf16.mxu0 %v766
    %1103 = vmatmul.mubr.bf16.gmra.mrb[0].mxu0 %v672
    %v1104 = vpop.f32.mrb[0].mxu0
    %v1105 = vadd.f32 %v1064, %v1104
    %v1106 = vpop.f32.mrb[0].mxu0
    %v1107 = vpop.f32.mrb[0].mxu0
    %v1108 = vadd.f32 %v1067, %v1107
    %v1109 = vpop.f32.mrb[0].mxu0
    %1110 = vdwg.mxu0
    %v1111 = vmax.f32 %v1105, 0.0
    %v1112 = vmax.f32 %v1108, 0.0
    %v1113 = vpack.c.bf16 %v1112, %v1111
    %v1114 = vld [vmem:[#allocation8] sm:$0xf]
    %v1115 = vld [vmem:[#allocation8 + $0x4] sm:$0xf]
    %v1116 = vld [vmem:[#allocation8 + $0x8] sm:$0xf]
    %v1117 = vld [vmem:[#allocation8 + $0xc] sm:$0xf]
    %v1118 = vld [vmem:[#allocation8 + $0x10] sm:$0xf]
    %v1119 = vld [vmem:[#allocation8 + $0x14] sm:$0xf]
    %v1120 = vld [vmem:[#allocation8 + $0x18] sm:$0xf]
    %v1121 = vld [vmem:[#allocation8 + $0x1c] sm:$0xf]
    %v1122 = vld [vmem:[#allocation8 + $0x20] sm:$0xf]
    %v1123 = vld [vmem:[#allocation8 + $0x24] sm:$0xf]
    %v1124 = vld [vmem:[#allocation8 + $0x28] sm:$0xf]
    %v1125 = vld [vmem:[#allocation8 + $0x2c] sm:$0xf]
    %v1126 = vld [vmem:[#allocation8 + $0x30] sm:$0xf]
    %v1127 = vld [vmem:[#allocation8 + $0x34] sm:$0xf]
    %v1128 = vld [vmem:[#allocation8 + $0x38] sm:$0xf]
    %v1129 = vld [vmem:[#allocation8 + $0x3c] sm:$0xf]
    %v1130 = vld [vmem:[%s6] sm:$0x1]
    %v1132 = vlaneseq
    %v1133 = vshrl.u32 %v1132, 7
    %v1134 = vsub.s32 0, %v1133
    %v1135 = vrot.slane %v1130, %v1134
    %v1153 = vunpack.c.l.b16 %v1114
    %v1154 = vunpack.c.l.b16 %v1115
    %v1155 = vunpack.c.l.b16 %v1116
    %v1156 = vunpack.c.l.b16 %v1117
    %v1157 = vunpack.c.l.b16 %v1118
    %v1158 = vunpack.c.l.b16 %v1119
    %v1159 = vunpack.c.l.b16 %v1120
    %v1160 = vunpack.c.l.b16 %v1121
    %v1161 = vunpack.c.l.b16 %v1122
    %v1162 = vunpack.c.l.b16 %v1123
    %v1163 = vunpack.c.l.b16 %v1124
    %v1164 = vunpack.c.l.b16 %v1125
    %v1165 = vunpack.c.l.b16 %v1126
    %v1166 = vunpack.c.l.b16 %v1127
    %v1167 = vunpack.c.l.b16 %v1128
    %v1168 = vunpack.c.l.b16 %v1129
    %v1169 = vpack.c.b16 %v1154, %v1153
    %v1170 = vpack.c.b16 %v1156, %v1155
    %v1171 = vpack.c.b16 %v1158, %v1157
    %v1172 = vpack.c.b16 %v1160, %v1159
    %v1173 = vpack.c.b16 %v1162, %v1161
    %v1174 = vpack.c.b16 %v1164, %v1163
    %v1175 = vpack.c.b16 %v1166, %v1165
    %v1176 = vpack.c.b16 %v1168, %v1167
    %1185 = vmatprep.subr.bf16.mxu0 0
    %1186 = vmatpush1.bf16.msra.mxu0 %v1169
    %1187 = vmatprep.subr.bf16.mxu0 0
    %1188 = vmatpush1.bf16.msra.mxu0 %v1170
    %1189 = vmatprep.subr.bf16.mxu0 0
    %1190 = vmatpush1.bf16.msra.mxu0 %v1171
    %1191 = vmatprep.subr.bf16.mxu0 0
    %1192 = vmatpush1.bf16.msra.mxu0 %v1172
    %1193 = vmatprep.subr.bf16.mxu0 0
    %1194 = vmatpush1.bf16.msra.mxu0 %v1173
    %1195 = vmatprep.subr.bf16.mxu0 0
    %1196 = vmatpush1.bf16.msra.mxu0 %v1174
    %1197 = vmatprep.subr.bf16.mxu0 0
    %1198 = vmatpush1.bf16.msra.mxu0 %v1175
    %1199 = vmatprep.subr.bf16.mxu0 0
    %1200 = vmatpush1.bf16.msra.mxu0 %v1176
    %1201 = vmatprep.subr.bf16.mxu0 0
    %1202 = vmatpush1.bf16.msra.mxu0 0
    %1203 = vmatprep.subr.bf16.mxu0 0
    %1204 = vmatpush1.bf16.msra.mxu0 0
    %1205 = vmatprep.subr.bf16.mxu0 0
    %1206 = vmatpush1.bf16.msra.mxu0 0
    %1207 = vmatprep.subr.bf16.mxu0 0
    %1208 = vmatpush1.bf16.msra.mxu0 0
    %1209 = vmatprep.subr.bf16.mxu0 0
    %1210 = vmatpush1.bf16.msra.mxu0 0
    %1211 = vmatprep.subr.bf16.mxu0 0
    %1212 = vmatpush1.bf16.msra.mxu0 0
    %1213 = vmatprep.subr.bf16.mxu0 0
    %1214 = vmatpush1.bf16.msra.mxu0 0
    %1215 = vmatprep.subr.bf16.mxu0 0
    %1216 = vmatpush1.bf16.msra.mxu0 0
    %1217 = vmatprep.mubr.bf16.mxu0 0
    %1218 = vmatmul.mubr.bf16.gmra.mrb[0].mxu0 %v1113
    %v1219 = vpop.f32.mrb[0].mxu0
    %v1220 = vadd.f32 %v1135, %v1219
    %v1221 = vpop.f32.mrb[0].mxu0
    %v1222 = vpop.f32.mrb[0].mxu0
    %v1223 = vadd.f32 %v1135, %v1222
    %v1224 = vpop.f32.mrb[0].mxu0
    %1225 = vdwg.mxu0
    %1226 = vst [vmem:[#allocation10] sm:$0xff] %v1220
    %1227 = vst [vmem:[#allocation10 + $0x8] sm:$0xff] %v1223
    // Predicated region
    $region46: #{tpu_custom_call.1} parent=1 // pred_check
      _
    $region47: #{tpu_custom_call.1} parent=1 // pred_check_branch
      %1229 = sbr.rel (0) target = $region49
    $region48: #{tpu_custom_call.1} parent=1 // pred_region
      %s1231 = ssub.s32 256, 256
      %1232 = vsyncadd [#allocation4], %s1231
      %s1233 = sshll.u32 [#allocation10], 4
      %s1234 = int_to_ptr.vmem [resolvable:$true] %s1233
      %1239 = dma.vmem_to_hbm [thread:$0]  %s1234, 256, %s7, [#allocation4], 128, 128, 8
    $region49: #{tpu_custom_call.1} parent=1 // pred_fallthru
      _
    // Predicated region
    $region50: #{tpu_custom_call.1} parent=1 // pred_check
      _
    $region51: #{tpu_custom_call.1} parent=1 // pred_check_branch
      %1241 = sbr.rel (0) target = $region53
    $region52: #{tpu_custom_call.1} parent=1 // pred_region
      %1242 = dma.done [#allocation4], 256
    $region53: #{tpu_custom_call.1} parent=1 // pred_fallthru
      _
    %1243 = vsyncpa [#allocation3], 1
    %1244 = vsyncpa [#allocation6], 1
    %1245 = vsyncpa [#allocation9], 1
    %1246 = vsyncpa [#allocation4], 1

</llo_original>
